<compile_context>
chip_gen: v6e
topology: v6e:2x2x1
jax: 0.10.0
libtpu: 0.0.40
codegen_flags: <defaults>
</compile_context>

<pallas_src>
import jax
import jax.numpy as jnp
from jax.experimental import pallas as pl
from jax.experimental.pallas import tpu as pltpu

# ---- problem sizes (small, consistent with "[data count, feature size]" input) ----
N = 8              # data count
D_IN = 32          # input feature size
HID = 64           # feature-net hidden width
F_PEN = 32         # penultimate feature size
F_SIM = 16         # simclr projection size
N_CLS = 10         # classification classes
N_SHIFT = 4        # shift (augmentation) classes
N_DICT = 2         # number of SR dictionaries
K_ATOM = 64        # dictionary size (atoms per dictionary)
K_CAT = N_DICT * K_ATOM          # 128 -> lane-full ADMM operands
HEADS = N_CLS + F_SIM + N_SHIFT  # 30 (fused head lanes actually used)
LANES = 128
ADMM_ITERS = 5     # unrolled ADMM iterations (iteration 0 peeled in-kernel)
RHO = 1.0
LAM = 0.1
EPS = 1e-8         # ContrastiveOneClassSrNetOption.eps

# ---- packed bf16 weight-slab row offsets ----
R_W1 = 0
R_W2 = D_IN                      # 32
R_WH = D_IN + HID                # 96
WB_ROWS = D_IN + HID + F_PEN     # 128

# ---- packed f32 slab row offsets ----
R_BH = 0                         # fused head bias          [1,128]
R_B1 = 1                         # hidden bias   (lanes 0:64)
R_B2 = 2                         # penult bias   (lanes 0:32)
R_DP = 8                         # DP = dict_cat @ pmat_bd  [32,128]
R_PM = R_DP + F_PEN              # 40, block-diag ADMM factor [128,128]
FP_ROWS = R_PM + K_CAT           # 168

# ---- packed output slab row offsets ----
R_HEADS = 0                      # cls|simclr|shift (zero-padded to 128 lanes)
R_COEF = N                       # lane-dense sr_coef  [N, K_CAT]
R_PENSR = 2 * N                  # pen (lanes 0:32) | sr_feature (lanes 32:64)
OUT_ROWS = 3 * N                 # 24


# --------------------------- fused forward kernel ---------------------------
def cocsr_kernel(x_ref, wb_ref, fp_ref, out_ref):
    # ---- static (zero-cost) slices of the packed parameter slabs ----
    w1 = wb_ref[R_W1:R_W1 + D_IN, 0:HID]            # [32, 64]  bf16
    w2 = wb_ref[R_W2:R_W2 + HID, 0:F_PEN]           # [64, 32]  bf16
    wh = wb_ref[R_WH:R_WH + F_PEN, :]               # [32,128]  bf16 (fused heads)
    b_h = fp_ref[R_BH:R_BH + 1, :]                  # [1,128]   f32
    b1 = fp_ref[R_B1:R_B1 + 1, 0:HID]               # [1, 64]
    b2 = fp_ref[R_B2:R_B2 + 1, 0:F_PEN]             # [1, 32]
    dp = fp_ref[R_DP:R_DP + F_PEN, :]               # [32,128]  f32  (= D @ P)
    pmat = fp_ref[R_PM:R_PM + K_CAT, :]             # [128,128] f32  (block-diag P)

    # ---- feature net: bf16 MXU operands, f32 accumulation ----
    x = x_ref[...].astype(jnp.bfloat16)
    h = jnp.maximum(
        jnp.dot(x, w1, preferred_element_type=jnp.float32) + b1, 0.0)
    pen = jnp.maximum(
        jnp.dot(h.astype(jnp.bfloat16), w2, preferred_element_type=jnp.float32) + b2, 0.0)

    # fused classification | simclr | shift heads: one [N,32]@[32,128] matmul
    heads = jnp.dot(pen.astype(jnp.bfloat16), wh,
                    preferred_element_type=jnp.float32) + b_h

    # ---- sr_feature: F.normalize(pen.t(), dim=0, eps) == row-normalize pen ----
    # 1/max(||x||, eps) == rsqrt(max(||x||^2, eps^2)) -> single EUP rsqrt.
    sumsq = jnp.sum(pen * pen, axis=1, keepdims=True)
    y = pen * jax.lax.rsqrt(jnp.maximum(sumsq, EPS * EPS))     # [N, F_PEN] f32

    # ---- ADMM lasso over both dictionaries at once (block-diag P) ----
    # Iteration 0 peeled: z=u=0 -> xk0 = (y @ D) @ P = y @ DP.
    thr = LAM / RHO
    q = jnp.dot(y, dp, preferred_element_type=jnp.float32)     # [N, K_CAT] f32
    xk = q
    z = xk - jnp.clip(xk, -thr, thr)                           # soft-threshold
    u = xk - z
    for _ in range(ADMM_ITERS - 1):                            # 4 remaining iterations
        xk = q + jnp.dot(RHO * (z - u), pmat, preferred_element_type=jnp.float32)
        v = xk + u
        z = v - jnp.clip(v, -thr, thr)
        u = u + xk - z

    # ---- single lane-dense output slab (3 unmasked 128-lane row-block stores) ----
    out_ref[R_HEADS:R_HEADS + N, :] = heads
    out_ref[R_COEF:R_COEF + N, :] = z
    out_ref[R_PENSR:R_PENSR + N, :] = jnp.concatenate(
        [pen, y, jnp.zeros((N, LANES - 2 * F_PEN), jnp.float32)], axis=1)


# ------------------------------ wrapper ------------------------------
def cocsr_forward(x, params):
    """Mirrors ContrastiveOneClassSrNet.forward with default flags/options."""
    out = pl.pallas_call(
        cocsr_kernel,
        out_shape=jax.ShapeDtypeStruct((OUT_ROWS, LANES), jnp.float32),
        in_specs=[pl.BlockSpec(memory_space=pltpu.MemorySpace.VMEM)] * 3,
        out_specs=pl.BlockSpec(memory_space=pltpu.MemorySpace.VMEM),
    )(x, params['wslab'], params['fslab'])

    # Split the packed output slab (cheap XLA slices on the host-side graph).
    heads = out[R_HEADS:R_HEADS + N]
    coef_flat = out[R_COEF:R_COEF + N]
    pen_sr = out[R_PENSR:R_PENSR + N]

    cls = heads[:, :N_CLS]
    sim = heads[:, N_CLS:N_CLS + F_SIM]
    shift = heads[:, N_CLS + F_SIM:HEADS]
    pen = pen_sr[:, :F_PEN]
    srfeat = pen_sr[:, F_PEN:2 * F_PEN]
    # transpose_sr_coef=False -> [dictionary number][dictionary size, data count]
    coef = jnp.transpose(coef_flat.reshape(N, N_DICT, K_ATOM), (1, 2, 0))

    aux = {
        'penultimate': pen,       # [N, F_PEN]
        'simclr': sim,            # [N, F_SIM]
        'shift': shift,           # [N, N_SHIFT]
        'sr_feature': srfeat,     # [N, F_PEN]  (normalized, = sr_feature_vec.t())
        'sr_coef': coef,          # [N_DICT, K_ATOM, N]
    }
    return cls, aux               # (output, _aux)


# ------------------------------ params ------------------------------
def init_params(key):
    keys = jax.random.split(key, 6)

    def w(k, shape, scale=0.1):
        return (scale * jax.random.normal(k, shape)).astype(jnp.float32)

    w1 = w(keys[0], (D_IN, HID))
    w2 = w(keys[1], (HID, F_PEN))
    wc = w(keys[2], (F_PEN, N_CLS))
    wz = w(keys[3], (F_PEN, F_SIM))
    ws = w(keys[4], (F_PEN, N_SHIFT))

    # Single zero-padded bf16 weight slab [128,128]: w1 | w2 | fused heads.
    wb = jnp.zeros((WB_ROWS, LANES), jnp.float32)
    wb = wb.at[R_W1:R_W1 + D_IN, 0:HID].set(w1)
    wb = wb.at[R_W2:R_W2 + HID, 0:F_PEN].set(w2)
    wb = wb.at[R_WH:R_WH + F_PEN, 0:N_CLS].set(wc)
    wb = wb.at[R_WH:R_WH + F_PEN, N_CLS:N_CLS + F_SIM].set(wz)
    wb = wb.at[R_WH:R_WH + F_PEN, N_CLS + F_SIM:HEADS].set(ws)
    wslab = wb.astype(jnp.bfloat16)

    # SR dictionaries, unit-norm atoms: [N_DICT, F_PEN, K_ATOM]
    d = w(keys[5], (N_DICT, F_PEN, K_ATOM), 1.0)
    d = d / jnp.maximum(jnp.linalg.norm(d, axis=1, keepdims=True), EPS)
    # Lane-concatenated dictionary [F_PEN, K_CAT] (dict 0 lanes 0:64, dict 1 lanes 64:128).
    dict_cat = jnp.transpose(d, (1, 0, 2)).reshape(F_PEN, K_CAT)

    # ADMM precomputed factor inv(D^T D + rho I), assembled block-diagonally so the
    # packed [8,128]@[128,128] ADMM step is exactly the two independent problems.
    # DP = dict_cat @ pmat_bd lets the kernel peel iteration 0 (z=u=0).
    # TODO(synk): matrix inverse has no clean Pallas equivalent; kept in plain JAX glue.
    gram = jnp.einsum('dfk,dfl->dkl', d, d)
    pmat = jnp.linalg.inv(gram + RHO * jnp.eye(K_ATOM, dtype=jnp.float32)).astype(jnp.float32)
    pmat_bd = jax.scipy.linalg.block_diag(*[pmat[i] for i in range(N_DICT)])
    dp = (dict_cat @ pmat_bd).astype(jnp.float32)

    # f32 slab: biases (zero) rows 0..2, DP rows 8..39, block-diag P rows 40..167.
    fp = jnp.zeros((FP_ROWS, LANES), jnp.float32)
    fp = fp.at[R_DP:R_DP + F_PEN, :].set(dp)
    fp = fp.at[R_PM:R_PM + K_CAT, :].set(pmat_bd)

    return dict(wslab=wslab, fslab=fp)


if __name__ == "__main__":
    key = jax.random.PRNGKey(0)
    kx, kp = jax.random.split(key)
    params = init_params(kp)
    x = jax.random.normal(kx, (N, D_IN), dtype=jnp.float32)

    out, aux = cocsr_forward(x, params)
    jax.block_until_ready((out, aux))

    assert out.shape == (N, N_CLS)
    assert aux['penultimate'].shape == (N, F_PEN)
    assert aux['simclr'].shape == (N, F_SIM)
    assert aux['shift'].shape == (N, N_SHIFT)
    assert aux['sr_feature'].shape == (N, F_PEN)
    assert aux['sr_coef'].shape == (N_DICT, K_ATOM, N)
    print("KERNEL_OK")
</pallas_src>

<mosaic_0001>
module attributes {stable_mosaic.version = 11 : i64} {
  func.func @cocsr_kernel(%arg0: memref<8x32xf32, #tpu.memory_space<vmem>>, %arg1: memref<128x128xbf16, #tpu.memory_space<vmem>>, %arg2: memref<168x128xf32, #tpu.memory_space<vmem>>, %arg3: memref<24x128xf32, #tpu.memory_space<vmem>>) attributes {dimension_semantics = [], scalar_prefetch = 0 : i64, scratch_operands = 0 : i64, tpu.core_type = #tpu.core_type<tc>} {
    %c0 = arith.constant 0 : index
    %c0_0 = arith.constant 0 : index
    %0 = vector.load %arg1[%c0, %c0_0] : memref<128x128xbf16, #tpu.memory_space<vmem>>, vector<32x64xbf16>
    %c32 = arith.constant 32 : index
    %c0_1 = arith.constant 0 : index
    %1 = vector.load %arg1[%c32, %c0_1] : memref<128x128xbf16, #tpu.memory_space<vmem>>, vector<64x32xbf16>
    %c96 = arith.constant 96 : index
    %c0_2 = arith.constant 0 : index
    %2 = vector.load %arg1[%c96, %c0_2] : memref<128x128xbf16, #tpu.memory_space<vmem>>, vector<32x128xbf16>
    %c0_3 = arith.constant 0 : index
    %c0_4 = arith.constant 0 : index
    %3 = vector.load %arg2[%c0_3, %c0_4] : memref<168x128xf32, #tpu.memory_space<vmem>>, vector<1x128xf32>
    %c1 = arith.constant 1 : index
    %c0_5 = arith.constant 0 : index
    %4 = vector.load %arg2[%c1, %c0_5] : memref<168x128xf32, #tpu.memory_space<vmem>>, vector<1x64xf32>
    %c2 = arith.constant 2 : index
    %c0_6 = arith.constant 0 : index
    %5 = vector.load %arg2[%c2, %c0_6] : memref<168x128xf32, #tpu.memory_space<vmem>>, vector<1x32xf32>
    %c8 = arith.constant 8 : index
    %c0_7 = arith.constant 0 : index
    %6 = vector.load %arg2[%c8, %c0_7] : memref<168x128xf32, #tpu.memory_space<vmem>>, vector<32x128xf32>
    %c40 = arith.constant 40 : index
    %c0_8 = arith.constant 0 : index
    %7 = vector.load %arg2[%c40, %c0_8] : memref<168x128xf32, #tpu.memory_space<vmem>>, vector<128x128xf32>
    %c0_9 = arith.constant 0 : index
    %c0_10 = arith.constant 0 : index
    %8 = vector.load %arg0[%c0_9, %c0_10] : memref<8x32xf32, #tpu.memory_space<vmem>>, vector<8x32xf32>
    %9 = arith.truncf %8 : vector<8x32xf32> to vector<8x32xbf16>
    %cst = arith.constant dense<0.000000e+00> : vector<8x64xf32>
    %10 = tpu.matmul %9, %0, %cst {dimension_numbers = #tpu.dot_dimension_numbers<[1], [0], [0], [1], [0, 0, 1, 1], [], []>} : vector<8x32xbf16>, vector<32x64xbf16>, vector<8x64xf32> -> vector<8x64xf32>
    %11 = vector.broadcast %4 : vector<1x64xf32> to vector<8x64xf32>
    %12 = arith.addf %10, %11 : vector<8x64xf32>
    %cst_11 = arith.constant 0.000000e+00 : f32
    %13 = vector.broadcast %cst_11 : f32 to vector<8x64xf32>
    %14 = arith.maximumf %12, %13 : vector<8x64xf32>
    %15 = arith.truncf %14 : vector<8x64xf32> to vector<8x64xbf16>
    %cst_12 = arith.constant dense<0.000000e+00> : vector<8x32xf32>
    %16 = tpu.matmul %15, %1, %cst_12 {dimension_numbers = #tpu.dot_dimension_numbers<[1], [0], [0], [1], [0, 0, 1, 1], [], []>} : vector<8x64xbf16>, vector<64x32xbf16>, vector<8x32xf32> -> vector<8x32xf32>
    %17 = vector.broadcast %5 : vector<1x32xf32> to vector<8x32xf32>
    %18 = arith.addf %16, %17 : vector<8x32xf32>
    %cst_13 = arith.constant 0.000000e+00 : f32
    %19 = vector.broadcast %cst_13 : f32 to vector<8x32xf32>
    %20 = arith.maximumf %18, %19 : vector<8x32xf32>
    %21 = arith.truncf %20 : vector<8x32xf32> to vector<8x32xbf16>
    %cst_14 = arith.constant dense<0.000000e+00> : vector<8x128xf32>
    %22 = tpu.matmul %21, %2, %cst_14 {dimension_numbers = #tpu.dot_dimension_numbers<[1], [0], [0], [1], [0, 0, 1, 1], [], []>} : vector<8x32xbf16>, vector<32x128xbf16>, vector<8x128xf32> -> vector<8x128xf32>
    %23 = vector.broadcast %3 : vector<1x128xf32> to vector<8x128xf32>
    %24 = arith.addf %22, %23 : vector<8x128xf32>
    %25 = arith.mulf %20, %20 : vector<8x32xf32>
    %cst_15 = arith.constant dense<0.000000e+00> : vector<8xf32>
    %26 = vector.multi_reduction <add>, %25, %cst_15 [1] : vector<8x32xf32> to vector<8xf32>
    %27 = vector.shape_cast %26 : vector<8xf32> to vector<8x1xf32>
    %cst_16 = arith.constant 1.000000e-16 : f32
    %28 = vector.broadcast %cst_16 : f32 to vector<8x1xf32>
    %29 = arith.maximumf %27, %28 : vector<8x1xf32>
    %30 = math.rsqrt %29 : vector<8x1xf32>
    %31 = vector.broadcast %30 : vector<8x1xf32> to vector<8x32xf32>
    %32 = arith.mulf %20, %31 : vector<8x32xf32>
    %cst_17 = arith.constant dense<0.000000e+00> : vector<8x128xf32>
    %33 = tpu.matmul %32, %6, %cst_17 {dimension_numbers = #tpu.dot_dimension_numbers<[1], [0], [0], [1], [0, 0, 1, 1], [], []>} : vector<8x32xf32>, vector<32x128xf32>, vector<8x128xf32> -> vector<8x128xf32>
    %cst_18 = arith.constant -1.000000e-01 : f32
    %cst_19 = arith.constant 1.000000e-01 : f32
    %34 = vector.broadcast %cst_18 : f32 to vector<8x128xf32>
    %35 = arith.maximumf %34, %33 : vector<8x128xf32>
    %36 = vector.broadcast %cst_19 : f32 to vector<8x128xf32>
    %37 = arith.minimumf %36, %35 : vector<8x128xf32>
    %38 = arith.subf %33, %37 : vector<8x128xf32>
    %39 = arith.subf %33, %38 : vector<8x128xf32>
    %40 = arith.subf %38, %39 : vector<8x128xf32>
    %cst_20 = arith.constant 1.000000e+00 : f32
    %41 = vector.broadcast %cst_20 : f32 to vector<8x128xf32>
    %42 = arith.mulf %41, %40 : vector<8x128xf32>
    %cst_21 = arith.constant dense<0.000000e+00> : vector<8x128xf32>
    %43 = tpu.matmul %42, %7, %cst_21 {dimension_numbers = #tpu.dot_dimension_numbers<[1], [0], [0], [1], [0, 0, 1, 1], [], []>} : vector<8x128xf32>, vector<128x128xf32>, vector<8x128xf32> -> vector<8x128xf32>
    %44 = arith.addf %33, %43 : vector<8x128xf32>
    %45 = arith.addf %44, %39 : vector<8x128xf32>
    %cst_22 = arith.constant -1.000000e-01 : f32
    %cst_23 = arith.constant 1.000000e-01 : f32
    %46 = vector.broadcast %cst_22 : f32 to vector<8x128xf32>
    %47 = arith.maximumf %46, %45 : vector<8x128xf32>
    %48 = vector.broadcast %cst_23 : f32 to vector<8x128xf32>
    %49 = arith.minimumf %48, %47 : vector<8x128xf32>
    %50 = arith.subf %45, %49 : vector<8x128xf32>
    %51 = arith.addf %39, %44 : vector<8x128xf32>
    %52 = arith.subf %51, %50 : vector<8x128xf32>
    %53 = arith.subf %50, %52 : vector<8x128xf32>
    %cst_24 = arith.constant 1.000000e+00 : f32
    %54 = vector.broadcast %cst_24 : f32 to vector<8x128xf32>
    %55 = arith.mulf %54, %53 : vector<8x128xf32>
    %cst_25 = arith.constant dense<0.000000e+00> : vector<8x128xf32>
    %56 = tpu.matmul %55, %7, %cst_25 {dimension_numbers = #tpu.dot_dimension_numbers<[1], [0], [0], [1], [0, 0, 1, 1], [], []>} : vector<8x128xf32>, vector<128x128xf32>, vector<8x128xf32> -> vector<8x128xf32>
    %57 = arith.addf %33, %56 : vector<8x128xf32>
    %58 = arith.addf %57, %52 : vector<8x128xf32>
    %cst_26 = arith.constant -1.000000e-01 : f32
    %cst_27 = arith.constant 1.000000e-01 : f32
    %59 = vector.broadcast %cst_26 : f32 to vector<8x128xf32>
    %60 = arith.maximumf %59, %58 : vector<8x128xf32>
    %61 = vector.broadcast %cst_27 : f32 to vector<8x128xf32>
    %62 = arith.minimumf %61, %60 : vector<8x128xf32>
    %63 = arith.subf %58, %62 : vector<8x128xf32>
    %64 = arith.addf %52, %57 : vector<8x128xf32>
    %65 = arith.subf %64, %63 : vector<8x128xf32>
    %66 = arith.subf %63, %65 : vector<8x128xf32>
    %cst_28 = arith.constant 1.000000e+00 : f32
    %67 = vector.broadcast %cst_28 : f32 to vector<8x128xf32>
    %68 = arith.mulf %67, %66 : vector<8x128xf32>
    %cst_29 = arith.constant dense<0.000000e+00> : vector<8x128xf32>
    %69 = tpu.matmul %68, %7, %cst_29 {dimension_numbers = #tpu.dot_dimension_numbers<[1], [0], [0], [1], [0, 0, 1, 1], [], []>} : vector<8x128xf32>, vector<128x128xf32>, vector<8x128xf32> -> vector<8x128xf32>
    %70 = arith.addf %33, %69 : vector<8x128xf32>
    %71 = arith.addf %70, %65 : vector<8x128xf32>
    %cst_30 = arith.constant -1.000000e-01 : f32
    %cst_31 = arith.constant 1.000000e-01 : f32
    %72 = vector.broadcast %cst_30 : f32 to vector<8x128xf32>
    %73 = arith.maximumf %72, %71 : vector<8x128xf32>
    %74 = vector.broadcast %cst_31 : f32 to vector<8x128xf32>
    %75 = arith.minimumf %74, %73 : vector<8x128xf32>
    %76 = arith.subf %71, %75 : vector<8x128xf32>
    %77 = arith.addf %65, %70 : vector<8x128xf32>
    %78 = arith.subf %77, %76 : vector<8x128xf32>
    %79 = arith.subf %76, %78 : vector<8x128xf32>
    %cst_32 = arith.constant 1.000000e+00 : f32
    %80 = vector.broadcast %cst_32 : f32 to vector<8x128xf32>
    %81 = arith.mulf %80, %79 : vector<8x128xf32>
    %cst_33 = arith.constant dense<0.000000e+00> : vector<8x128xf32>
    %82 = tpu.matmul %81, %7, %cst_33 {dimension_numbers = #tpu.dot_dimension_numbers<[1], [0], [0], [1], [0, 0, 1, 1], [], []>} : vector<8x128xf32>, vector<128x128xf32>, vector<8x128xf32> -> vector<8x128xf32>
    %83 = arith.addf %33, %82 : vector<8x128xf32>
    %84 = arith.addf %83, %78 : vector<8x128xf32>
    %cst_34 = arith.constant -1.000000e-01 : f32
    %cst_35 = arith.constant 1.000000e-01 : f32
    %85 = vector.broadcast %cst_34 : f32 to vector<8x128xf32>
    %86 = arith.maximumf %85, %84 : vector<8x128xf32>
    %87 = vector.broadcast %cst_35 : f32 to vector<8x128xf32>
    %88 = arith.minimumf %87, %86 : vector<8x128xf32>
    %89 = arith.subf %84, %88 : vector<8x128xf32>
    %c0_36 = arith.constant 0 : index
    %c0_37 = arith.constant 0 : index
    %90 = vector.load %arg3[%c0_36, %c0_37] : memref<24x128xf32, #tpu.memory_space<vmem>>, vector<8x128xf32>
    tpu.vector_store %arg3[%c0_36, %c0_37], %24 {strides = array<i32>} : memref<24x128xf32, #tpu.memory_space<vmem>>, vector<8x128xf32>,
    %c8_38 = arith.constant 8 : index
    %c0_39 = arith.constant 0 : index
    %91 = vector.load %arg3[%c8_38, %c0_39] : memref<24x128xf32, #tpu.memory_space<vmem>>, vector<8x128xf32>
    tpu.vector_store %arg3[%c8_38, %c0_39], %89 {strides = array<i32>} : memref<24x128xf32, #tpu.memory_space<vmem>>, vector<8x128xf32>,
    %cst_40 = arith.constant 0.000000e+00 : f32
    %92 = vector.broadcast %cst_40 : f32 to vector<8x64xf32>
    %93 = tpu.concatenate %20, %32, %92 in 1 : vector<8x32xf32>, vector<8x32xf32>, vector<8x64xf32> -> vector<8x128xf32>
    %c16 = arith.constant 16 : index
    %c0_41 = arith.constant 0 : index
    %94 = vector.load %arg3[%c16, %c0_41] : memref<24x128xf32, #tpu.memory_space<vmem>>, vector<8x128xf32>
    tpu.vector_store %arg3[%c16, %c0_41], %93 {strides = array<i32>} : memref<24x128xf32, #tpu.memory_space<vmem>>, vector<8x128xf32>,
    return
  }
}

</mosaic_0001>

<llo_original>
// kernel: tpu_custom_call.1
$region0: #{tpu_custom_call.1}
  #allocation0 [shape = 'u32[]', space=smem, size = 0x4, offset = 0x4, fixed_abs, tag = 'smem constant byte address 0x4 - core index']
  #allocation1 [shape = 'u32[144,128]{1,0:T(1,128)}', space=vmem, size = 0x12000, scoped, tag = 'internal scratch']
  %s0 = inlined_call_operand.hbm [shape: f32[8,32], index: 0, kind: input, shape index: {}]
  %s1 = inlined_call_operand.hbm [shape: bf16[128,128], index: 1, kind: input, shape index: {}]
  %s2 = inlined_call_operand.hbm [shape: f32[168,128], index: 2, kind: input, shape index: {}]
  %s3 = inlined_call_operand.hbm [shape: f32[24,128], index: 3, kind: output, shape index: {}]
  %s4 = sld [smem:[#allocation0]]
  $region34: #{tpu_custom_call.1} parent=0
    _
  %s6 = ssub.s32 1, %s4
  %s7 = scalar_select 0, %s6, %s4
  $region1: #{tpu_custom_call.1} parent=0
    #allocation2 [shape = 'u8[4096]{0}', space=vmem, size = 0x1000, scoped, tag = 'input window, operand 0, single buffered']
    #allocation3 [shape = 's32[1]{0}', space=sflag, size = 0x4, scoped, tag = 'scoped memory for tpu_custom_call.1']
    #allocation4 [shape = 's32[1]{0}', space=sflag, size = 0x4, scoped, tag = 'scoped memory for tpu_custom_call.1']
    #allocation5 [shape = 'u8[32768]{0}', space=vmem, size = 0x8000, scoped, tag = 'input window, operand 1, single buffered']
    #allocation6 [shape = 's32[1]{0}', space=sflag, size = 0x4, scoped, tag = 'scoped memory for tpu_custom_call.1']
    #allocation7 [shape = 'u8[86016]{0}', space=vmem, size = 0x15000, scoped, tag = 'input window, operand 2, single buffered']
    #allocation8 [shape = 'u8[12288]{0}', space=vmem, size = 0x3000, scoped, tag = 'output window, operand 0, single buffered']
    %8 = vsyncpa [#allocation3], 0
    %9 = vsyncpa [#allocation6], 0
    %10 = vsyncpa [#allocation4], 0
    // Predicated region
    $region2: #{tpu_custom_call.1} parent=1 // pred_check
      _
    $region3: #{tpu_custom_call.1} parent=1 // pred_check_branch
      %12 = sbr.rel (0) target = $region5
    $region4: #{tpu_custom_call.1} parent=1 // pred_region
      %s14 = ssub.s32 128, 128
      %15 = vsyncadd [#allocation3], %s14
      %s17 = sshll.u32 [#allocation2], 4
      %s18 = int_to_ptr.vmem [resolvable:$true] %s17
      %20 = dma.hbm_to_vmem [thread:$0]  %s0, 128, %s18, [#allocation3]
    $region5: #{tpu_custom_call.1} parent=1 // pred_fallthru
      _
    // Predicated region
    $region6: #{tpu_custom_call.1} parent=1 // pred_check
      _
    $region7: #{tpu_custom_call.1} parent=1 // pred_check_branch
      %22 = sbr.rel (0) target = $region9
    $region8: #{tpu_custom_call.1} parent=1 // pred_region
      %s24 = ssub.s32 1024, 1024
      %25 = vsyncadd [#allocation6], %s24
      %s26 = sshll.u32 [#allocation5], 4
      %s27 = int_to_ptr.vmem [resolvable:$true] %s26
      %32 = dma.hbm_to_vmem [thread:$0]  %s1, 1024, %s27, [#allocation6], 64, 64, 4
    $region9: #{tpu_custom_call.1} parent=1 // pred_fallthru
      _
    // Predicated region
    $region10: #{tpu_custom_call.1} parent=1 // pred_check
      _
    $region11: #{tpu_custom_call.1} parent=1 // pred_check_branch
      %34 = sbr.rel (0) target = $region13
    $region12: #{tpu_custom_call.1} parent=1 // pred_region
      %s36 = ssub.s32 2688, 2688
      %37 = vsyncadd [#allocation6], %s36
      %s38 = sshll.u32 [#allocation7], 4
      %s39 = int_to_ptr.vmem [resolvable:$true] %s38
      %44 = dma.hbm_to_vmem [thread:$0]  %s2, 2688, %s39, [#allocation6], 128, 128, 8
    $region13: #{tpu_custom_call.1} parent=1 // pred_fallthru
      _
    // Predicated region
    $region14: #{tpu_custom_call.1} parent=1 // pred_check
      _
    $region15: #{tpu_custom_call.1} parent=1 // pred_check_branch
      %46 = sbr.rel (0) target = $region17
    $region16: #{tpu_custom_call.1} parent=1 // pred_region
      %47 = dma.done [#allocation3], 128
    $region17: #{tpu_custom_call.1} parent=1 // pred_fallthru
      _
    // Predicated region
    $region18: #{tpu_custom_call.1} parent=1 // pred_check
      _
    $region19: #{tpu_custom_call.1} parent=1 // pred_check_branch
      %49 = sbr.rel (0) target = $region21
    $region20: #{tpu_custom_call.1} parent=1 // pred_region
      %50 = dma.done [#allocation6], 1024
    $region21: #{tpu_custom_call.1} parent=1 // pred_fallthru
      _
    // Predicated region
    $region22: #{tpu_custom_call.1} parent=1 // pred_check
      _
    $region23: #{tpu_custom_call.1} parent=1 // pred_check_branch
      %52 = sbr.rel (0) target = $region25
    $region24: #{tpu_custom_call.1} parent=1 // pred_region
      %53 = dma.done [#allocation6], 2688
    $region25: #{tpu_custom_call.1} parent=1 // pred_fallthru
      _
    %v55 = vld [vmem:[#allocation5] sm:$0xf]
    %v56 = vld [vmem:[#allocation5 + $0x4] sm:$0xf]
    %v57 = vld [vmem:[#allocation5 + $0x8] sm:$0xf]
    %v58 = vld [vmem:[#allocation5 + $0xc] sm:$0xf]
    %v59 = vld [vmem:[#allocation5 + $0x10] sm:$0xf]
    %v60 = vld [vmem:[#allocation5 + $0x14] sm:$0xf]
    %v61 = vld [vmem:[#allocation5 + $0x18] sm:$0xf]
    %v62 = vld [vmem:[#allocation5 + $0x1c] sm:$0xf]
    %v63 = vld [vmem:[#allocation5 + $0x20] sm:$0xf]
    %v64 = vld [vmem:[#allocation5 + $0x24] sm:$0xf]
    %v65 = vld [vmem:[#allocation5 + $0x28] sm:$0xf]
    %v66 = vld [vmem:[#allocation5 + $0x2c] sm:$0xf]
    %v67 = vld [vmem:[#allocation5 + $0x30] sm:$0xf]
    %v68 = vld [vmem:[#allocation5 + $0x34] sm:$0xf]
    %v69 = vld [vmem:[#allocation5 + $0x38] sm:$0xf]
    %v70 = vld [vmem:[#allocation5 + $0x3c] sm:$0xf]
    %v71 = vld [vmem:[#allocation7] sm:$0x1]
    %v72 = vld [vmem:[#allocation7 + $0x1] sm:$0x1]
    %v73 = vld [vmem:[#allocation7 + $0x2] sm:$0x1]
    %v74 = vld [vmem:[#allocation7 + $0x8] sm:$0xff]
    %v75 = vld [vmem:[#allocation7 + $0x10] sm:$0xff]
    %v76 = vld [vmem:[#allocation7 + $0x18] sm:$0xff]
    %v77 = vld [vmem:[#allocation7 + $0x20] sm:$0xff]
    %v78 = vld [vmem:[#allocation7 + $0x28] sm:$0xff]
    %v79 = vld [vmem:[#allocation7 + $0x30] sm:$0xff]
    %v80 = vld [vmem:[#allocation7 + $0x38] sm:$0xff]
    %v81 = vld [vmem:[#allocation7 + $0x40] sm:$0xff]
    %v82 = vld [vmem:[#allocation7 + $0x48] sm:$0xff]
    %v83 = vld [vmem:[#allocation7 + $0x50] sm:$0xff]
    %v84 = vld [vmem:[#allocation7 + $0x58] sm:$0xff]
    %v85 = vld [vmem:[#allocation7 + $0x60] sm:$0xff]
    %v86 = vld [vmem:[#allocation7 + $0x68] sm:$0xff]
    %v87 = vld [vmem:[#allocation7 + $0x70] sm:$0xff]
    %v88 = vld [vmem:[#allocation7 + $0x78] sm:$0xff]
    %v89 = vld [vmem:[#allocation7 + $0x80] sm:$0xff]
    %v90 = vld [vmem:[#allocation7 + $0x88] sm:$0xff]
    %v91 = vld [vmem:[#allocation7 + $0x90] sm:$0xff]
    %v92 = vld [vmem:[#allocation7 + $0x98] sm:$0xff]
    %v93 = vld [vmem:[#allocation7 + $0xa0] sm:$0xff]
    %v94 = vld [vmem:[#allocation2] sm:$0xff]
    %v95 = vpack.c.bf16 %v94, %v94
    %v96 = vlaneseq
    %v97 = vshrl.u32 %v96, 7
    %v98 = vsub.s32 0, %v97
    %v99 = vrot.slane %v72, %v98
    %v104 = vunpack.c.l.b16 %v55
    %v105 = vunpack.c.l.b16 %v56
    %v106 = vunpack.c.l.b16 %v57
    %v107 = vunpack.c.l.b16 %v58
    %v108 = vpack.c.b16 %v105, %v104
    %v109 = vpack.c.b16 %v107, %v106
    %vm112 = vcmask 261120
    %v114 = vsel %vm112, %v95, 0
    %116 = vmatprep.subr.bf16.mxu0 0
    %117 = vmatpush1.bf16.msra.mxu0 0
    %118 = vmatprep.subr.bf16.mxu0 0
    %119 = vmatpush1.bf16.msra.mxu0 0
    %120 = vmatprep.subr.bf16.mxu0 0
    %121 = vmatpush1.bf16.msra.mxu0 0
    %122 = vmatprep.subr.bf16.mxu0 0
    %123 = vmatpush1.bf16.msra.mxu0 0
    %124 = vmatprep.subr.bf16.mxu0 0
    %125 = vmatpush1.bf16.msra.mxu0 0
    %126 = vmatprep.subr.bf16.mxu0 0
    %127 = vmatpush1.bf16.msra.mxu0 0
    %128 = vmatprep.subr.bf16.mxu0 0
    %129 = vmatpush1.bf16.msra.mxu0 %v109
    %130 = vmatprep.subr.bf16.mxu0 0
    %131 = vmatpush1.bf16.msra.mxu0 %v108
    %132 = vmatprep.subr.bf16.mxu0 0
    %133 = vmatpush2.bf16.msra.mxu0 0
    %134 = vmatprep.subr.bf16.mxu0 0
    %135 = vmatpush2.bf16.msra.mxu0 0
    %136 = vmatprep.subr.bf16.mxu0 0
    %137 = vmatpush2.bf16.msra.mxu0 0
    %138 = vmatprep.subr.bf16.mxu0 0
    %139 = vmatpush2.bf16.msra.mxu0 0
    %140 = vmatprep.subr.bf16.mxu0 0
    %141 = vmatpush2.bf16.msra.mxu0 0
    %142 = vmatprep.subr.bf16.mxu0 0
    %143 = vmatpush2.bf16.msra.mxu0 0
    %144 = vmatprep.subr.bf16.mxu0 0
    %145 = vmatpush2.bf16.msra.mxu0 0
    %146 = vmatprep.subr.bf16.mxu0 0
    %147 = vmatpush2.bf16.msra.mxu0 0
    %148 = vmatprep.mubr.bf16.mxu0 0
    %149 = vmatmul.mubr.bf16.gmra.mxu0 %v114
    %v150 = vpop.f32.mrf.mxu0
    %v151 = vadd.f32 %v99, %v150
    %v152 = vpop.f32.mrf.mxu0
    %v153 = vpop.f32.mrf.mxu0
    %v154 = vpop.f32.mrf.mxu0
    %155 = vdwg.mxu0
    %v156 = vmax.f32 %v151, 0.0
    %v157 = vpack.c.bf16 %v156, %v156
    %v158 = vlaneseq
    %v159 = vshrl.u32 %v158, 7
    %v160 = vsub.s32 0, %v159
    %v161 = vrot.slane %v73, %v160
    %v170 = vunpack.c.l.b16 %v59
    %v171 = vunpack.c.l.b16 %v60
    %v172 = vunpack.c.l.b16 %v61
    %v173 = vunpack.c.l.b16 %v62
    %v174 = vunpack.c.l.b16 %v63
    %v175 = vunpack.c.l.b16 %v64
    %v176 = vunpack.c.l.b16 %v65
    %v177 = vunpack.c.l.b16 %v66
    %v178 = vpack.c.b16 %v171, %v170
    %v179 = vpack.c.b16 %v173, %v172
    %v180 = vpack.c.b16 %v175, %v174
    %v181 = vpack.c.b16 %v177, %v176
    %vm186 = vcmask 523264
    %v188 = vsel %vm186, %v157, 0
    %190 = vmatprep.subr.bf16.mxu0 0
    %191 = vmatpush1.bf16.msra.mxu0 0
    %192 = vmatprep.subr.bf16.mxu0 0
    %193 = vmatpush1.bf16.msra.mxu0 0
    %194 = vmatprep.subr.bf16.mxu0 0
    %195 = vmatpush1.bf16.msra.mxu0 0
    %196 = vmatprep.subr.bf16.mxu0 0
    %197 = vmatpush1.bf16.msra.mxu0 0
    %198 = vmatprep.subr.bf16.mxu0 0
    %199 = vmatpush1.bf16.msra.mxu0 %v181
    %200 = vmatprep.subr.bf16.mxu0 0
    %201 = vmatpush1.bf16.msra.mxu0 %v180
    %202 = vmatprep.subr.bf16.mxu0 0
    %203 = vmatpush1.bf16.msra.mxu0 %v179
    %204 = vmatprep.subr.bf16.mxu0 0
    %205 = vmatpush1.bf16.msra.mxu0 %v178
    %206 = vmatprep.subr.bf16.mxu0 0
    %207 = vmatpush2.bf16.msra.mxu0 0
    %208 = vmatprep.subr.bf16.mxu0 0
    %209 = vmatpush2.bf16.msra.mxu0 0
    %210 = vmatprep.subr.bf16.mxu0 0
    %211 = vmatpush2.bf16.msra.mxu0 0
    %212 = vmatprep.subr.bf16.mxu0 0
    %213 = vmatpush2.bf16.msra.mxu0 0
    %214 = vmatprep.subr.bf16.mxu0 0
    %215 = vmatpush2.bf16.msra.mxu0 0
    %216 = vmatprep.subr.bf16.mxu0 0
    %217 = vmatpush2.bf16.msra.mxu0 0
    %218 = vmatprep.subr.bf16.mxu0 0
    %219 = vmatpush2.bf16.msra.mxu0 0
    %220 = vmatprep.subr.bf16.mxu0 0
    %221 = vmatpush2.bf16.msra.mxu0 0
    %222 = vmatprep.mubr.bf16.mxu0 0
    %223 = vmatmul.mubr.bf16.gmra.mxu0 %v188
    %v224 = vpop.f32.mrf.mxu0
    %v225 = vadd.f32 %v161, %v224
    %v226 = vpop.f32.mrf.mxu0
    %v227 = vpop.f32.mrf.mxu0
    %v228 = vpop.f32.mrf.mxu0
    %229 = vdwg.mxu0
    %v230 = vmax.f32 %v225, 0.0
    %v231 = vpack.c.bf16 %v230, %v230
    %v232 = vlaneseq
    %v233 = vshrl.u32 %v232, 7
    %v234 = vsub.s32 0, %v233
    %v235 = vrot.slane %v71, %v234
    %v240 = vunpack.c.l.b16 %v67
    %v241 = vunpack.c.l.b16 %v68
    %v242 = vunpack.c.l.b16 %v69
    %v243 = vunpack.c.l.b16 %v70
    %v244 = vpack.c.b16 %v241, %v240
    %v245 = vpack.c.b16 %v243, %v242
    %v249 = vsel %vm112, %v231, 0
    %251 = vmatprep.subr.bf16.mxu0 0
    %252 = vmatpush1.bf16.msra.mxu0 0
    %253 = vmatprep.subr.bf16.mxu0 0
    %254 = vmatpush1.bf16.msra.mxu0 0
    %255 = vmatprep.subr.bf16.mxu0 0
    %256 = vmatpush1.bf16.msra.mxu0 0
    %257 = vmatprep.subr.bf16.mxu0 0
    %258 = vmatpush1.bf16.msra.mxu0 0
    %259 = vmatprep.subr.bf16.mxu0 0
    %260 = vmatpush1.bf16.msra.mxu0 0
    %261 = vmatprep.subr.bf16.mxu0 0
    %262 = vmatpush1.bf16.msra.mxu0 0
    %263 = vmatprep.subr.bf16.mxu0 0
    %264 = vmatpush1.bf16.msra.mxu0 %v245
    %265 = vmatprep.subr.bf16.mxu0 0
    %266 = vmatpush1.bf16.msra.mxu0 %v244
    %267 = vmatprep.subr.bf16.mxu0 0
    %268 = vmatpush2.bf16.msra.mxu0 0
    %269 = vmatprep.subr.bf16.mxu0 0
    %270 = vmatpush2.bf16.msra.mxu0 0
    %271 = vmatprep.subr.bf16.mxu0 0
    %272 = vmatpush2.bf16.msra.mxu0 0
    %273 = vmatprep.subr.bf16.mxu0 0
    %274 = vmatpush2.bf16.msra.mxu0 0
    %275 = vmatprep.subr.bf16.mxu0 0
    %276 = vmatpush2.bf16.msra.mxu0 0
    %277 = vmatprep.subr.bf16.mxu0 0
    %278 = vmatpush2.bf16.msra.mxu0 0
    %279 = vmatprep.subr.bf16.mxu0 0
    %280 = vmatpush2.bf16.msra.mxu0 0
    %281 = vmatprep.subr.bf16.mxu0 0
    %282 = vmatpush2.bf16.msra.mxu0 0
    %283 = vmatprep.mubr.bf16.mxu0 0
    %284 = vmatmul.mubr.bf16.gmra.mxu0 %v249
    %v285 = vpop.f32.mrf.mxu0
    %v286 = vadd.f32 %v235, %v285
    %v287 = vpop.f32.mrf.mxu0
    %v288 = vpop.f32.mrf.mxu0
    %v289 = vpop.f32.mrf.mxu0
    %290 = vdwg.mxu0
    %v291 = vmul.f32 %v230, %v230
    %v292 = vsel %vm112, %v291, 0.0
    %293 = vadd.xlane.f32.xlu0 %v292
    %v294 = vpop.xlane.xlu0 %293
    %v295 = vmax.f32 %v294, 1e-16
    %v296 = vrsqrt.pop %v295
    %v297 = vmul.f32 %v230, %v296
    %v299 = vsel %vm112, %v297, 0
    %301 = vmatprep.subr.mxu0 0.0
    %302 = vmatpush1.msra.mxu0 0.0
    %303 = vmatprep.subr.mxu0 0.0
    %304 = vmatpush1.msra.mxu0 0.0
    %305 = vmatprep.subr.mxu0 0.0
    %306 = vmatpush1.msra.mxu0 0.0
    %307 = vmatprep.subr.mxu0 0.0
    %308 = vmatpush1.msra.mxu0 0.0
    %309 = vmatprep.subr.mxu0 0.0
    %310 = vmatpush1.msra.mxu0 0.0
    %311 = vmatprep.subr.mxu0 0.0
    %312 = vmatpush1.msra.mxu0 0.0
    %313 = vmatprep.subr.mxu0 0.0
    %314 = vmatpush1.msra.mxu0 0.0
    %315 = vmatprep.subr.mxu0 0.0
    %316 = vmatpush1.msra.mxu0 0.0
    %317 = vmatprep.subr.mxu0 0.0
    %318 = vmatpush1.msra.mxu0 0.0
    %319 = vmatprep.subr.mxu0 0.0
    %320 = vmatpush1.msra.mxu0 0.0
    %321 = vmatprep.subr.mxu0 0.0
    %322 = vmatpush1.msra.mxu0 0.0
    %323 = vmatprep.subr.mxu0 0.0
    %324 = vmatpush1.msra.mxu0 0.0
    %325 = vmatprep.subr.mxu0 0.0
    %326 = vmatpush1.msra.mxu0 %v77
    %327 = vmatprep.subr.mxu0 0.0
    %328 = vmatpush1.msra.mxu0 %v76
    %329 = vmatprep.subr.mxu0 0.0
    %330 = vmatpush1.msra.mxu0 %v75
    %331 = vmatprep.subr.mxu0 0.0
    %332 = vmatpush1.msra.mxu0 %v74
    %333 = vmatprep.subr.mxu0 0.0
    %334 = vmatpush2.msra.mxu0 0.0
    %335 = vmatprep.subr.mxu0 0.0
    %336 = vmatpush2.msra.mxu0 0.0
    %337 = vmatprep.subr.mxu0 0.0
    %338 = vmatpush2.msra.mxu0 0.0
    %339 = vmatprep.subr.mxu0 0.0
    %340 = vmatpush2.msra.mxu0 0.0
    %341 = vmatprep.subr.mxu0 0.0
    %342 = vmatpush2.msra.mxu0 0.0
    %343 = vmatprep.subr.mxu0 0.0
    %344 = vmatpush2.msra.mxu0 0.0
    %345 = vmatprep.subr.mxu0 0.0
    %346 = vmatpush2.msra.mxu0 0.0
    %347 = vmatprep.subr.mxu0 0.0
    %348 = vmatpush2.msra.mxu0 0.0
    %349 = vmatprep.subr.mxu0 0.0
    %350 = vmatpush2.msra.mxu0 0.0
    %351 = vmatprep.subr.mxu0 0.0
    %352 = vmatpush2.msra.mxu0 0.0
    %353 = vmatprep.subr.mxu0 0.0
    %354 = vmatpush2.msra.mxu0 0.0
    %355 = vmatprep.subr.mxu0 0.0
    %356 = vmatpush2.msra.mxu0 0.0
    %357 = vmatprep.subr.mxu0 0.0
    %358 = vmatpush2.msra.mxu0 0.0
    %359 = vmatprep.subr.mxu0 0.0
    %360 = vmatpush2.msra.mxu0 0.0
    %361 = vmatprep.subr.mxu0 0.0
    %362 = vmatpush2.msra.mxu0 0.0
    %363 = vmatprep.subr.mxu0 0.0
    %364 = vmatpush2.msra.mxu0 0.0
    %365 = vmatprep.mubr.f32.mxu0 0.0
    %366 = vmatmul.mubr.f32.gmra.mxu0 %v299
    %v367 = vpop.f32.mrf.mxu0
    %v368 = vadd.f32 0.0, %v367
    %v369 = vpop.f32.mrf.mxu0
    %370 = vdwg.mxu0
    %v371 = vmax.f32 %v368, -0.1
    %v372 = vmin.f32 %v371, 0.1
    %v373 = vsub.f32 %v368, %v372
    %v374 = vsub.f32 %v368, %v373
    %v375 = vsub.f32 %v373, %v374
    %376 = vmatprep.subr.mxu0 0.0
    %377 = vmatpush1.msra.mxu0 %v93
    %378 = vmatprep.subr.mxu0 0.0
    %379 = vmatpush1.msra.mxu0 %v92
    %380 = vmatprep.subr.mxu0 0.0
    %381 = vmatpush1.msra.mxu0 %v91
    %382 = vmatprep.subr.mxu0 0.0
    %383 = vmatpush1.msra.mxu0 %v90
    %384 = vmatprep.subr.mxu0 0.0
    %385 = vmatpush1.msra.mxu0 %v89
    %386 = vmatprep.subr.mxu0 0.0
    %387 = vmatpush1.msra.mxu0 %v88
    %388 = vmatprep.subr.mxu0 0.0
    %389 = vmatpush1.msra.mxu0 %v87
    %390 = vmatprep.subr.mxu0 0.0
    %391 = vmatpush1.msra.mxu0 %v86
    %392 = vmatprep.subr.mxu0 0.0
    %393 = vmatpush1.msra.mxu0 %v85
    %394 = vmatprep.subr.mxu0 0.0
    %395 = vmatpush1.msra.mxu0 %v84
    %396 = vmatprep.subr.mxu0 0.0
    %397 = vmatpush1.msra.mxu0 %v83
    %398 = vmatprep.subr.mxu0 0.0
    %399 = vmatpush1.msra.mxu0 %v82
    %400 = vmatprep.subr.mxu0 0.0
    %401 = vmatpush1.msra.mxu0 %v81
    %402 = vmatprep.subr.mxu0 0.0
    %403 = vmatpush1.msra.mxu0 %v80
    %404 = vmatprep.subr.mxu0 0.0
    %405 = vmatpush1.msra.mxu0 %v79
    %406 = vmatprep.subr.mxu0 0.0
    %407 = vmatpush1.msra.mxu0 %v78
    %408 = vmatprep.subr.mxu0 0.0
    %409 = vmatpush2.msra.mxu0 0.0
    %410 = vmatprep.subr.mxu0 0.0
    %411 = vmatpush2.msra.mxu0 0.0
    %412 = vmatprep.subr.mxu0 0.0
    %413 = vmatpush2.msra.mxu0 0.0
    %414 = vmatprep.subr.mxu0 0.0
    %415 = vmatpush2.msra.mxu0 0.0
    %416 = vmatprep.subr.mxu0 0.0
    %417 = vmatpush2.msra.mxu0 0.0
    %418 = vmatprep.subr.mxu0 0.0
    %419 = vmatpush2.msra.mxu0 0.0
    %420 = vmatprep.subr.mxu0 0.0
    %421 = vmatpush2.msra.mxu0 0.0
    %422 = vmatprep.subr.mxu0 0.0
    %423 = vmatpush2.msra.mxu0 0.0
    %424 = vmatprep.subr.mxu0 0.0
    %425 = vmatpush2.msra.mxu0 0.0
    %426 = vmatprep.subr.mxu0 0.0
    %427 = vmatpush2.msra.mxu0 0.0
    %428 = vmatprep.subr.mxu0 0.0
    %429 = vmatpush2.msra.mxu0 0.0
    %430 = vmatprep.subr.mxu0 0.0
    %431 = vmatpush2.msra.mxu0 0.0
    %432 = vmatprep.subr.mxu0 0.0
    %433 = vmatpush2.msra.mxu0 0.0
    %434 = vmatprep.subr.mxu0 0.0
    %435 = vmatpush2.msra.mxu0 0.0
    %436 = vmatprep.subr.mxu0 0.0
    %437 = vmatpush2.msra.mxu0 0.0
    %438 = vmatprep.subr.mxu0 0.0
    %439 = vmatpush2.msra.mxu0 0.0
    %440 = vmatprep.mubr.f32.mxu0 0.0
    %441 = vmatmul.mubr.f32.gmra.mxu0 %v375
    %v442 = vpop.f32.mrf.mxu0
    %v443 = vadd.f32 0.0, %v442
    %v444 = vpop.f32.mrf.mxu0
    %445 = vdwg.mxu0
    %v446 = vadd.f32 %v368, %v443
    %v447 = vadd.f32 %v446, %v374
    %v448 = vmax.f32 %v447, -0.1
    %v449 = vmin.f32 %v448, 0.1
    %v450 = vsub.f32 %v447, %v449
    %v451 = vsub.f32 %v447, %v450
    %v452 = vsub.f32 %v450, %v451
    %453 = vmatprep.subr.mxu0 0.0
    %454 = vmatpush1.msra.mxu0 %v93
    %455 = vmatprep.subr.mxu0 0.0
    %456 = vmatpush1.msra.mxu0 %v92
    %457 = vmatprep.subr.mxu0 0.0
    %458 = vmatpush1.msra.mxu0 %v91
    %459 = vmatprep.subr.mxu0 0.0
    %460 = vmatpush1.msra.mxu0 %v90
    %461 = vmatprep.subr.mxu0 0.0
    %462 = vmatpush1.msra.mxu0 %v89
    %463 = vmatprep.subr.mxu0 0.0
    %464 = vmatpush1.msra.mxu0 %v88
    %465 = vmatprep.subr.mxu0 0.0
    %466 = vmatpush1.msra.mxu0 %v87
    %467 = vmatprep.subr.mxu0 0.0
    %468 = vmatpush1.msra.mxu0 %v86
    %469 = vmatprep.subr.mxu0 0.0
    %470 = vmatpush1.msra.mxu0 %v85
    %471 = vmatprep.subr.mxu0 0.0
    %472 = vmatpush1.msra.mxu0 %v84
    %473 = vmatprep.subr.mxu0 0.0
    %474 = vmatpush1.msra.mxu0 %v83
    %475 = vmatprep.subr.mxu0 0.0
    %476 = vmatpush1.msra.mxu0 %v82
    %477 = vmatprep.subr.mxu0 0.0
    %478 = vmatpush1.msra.mxu0 %v81
    %479 = vmatprep.subr.mxu0 0.0
    %480 = vmatpush1.msra.mxu0 %v80
    %481 = vmatprep.subr.mxu0 0.0
    %482 = vmatpush1.msra.mxu0 %v79
    %483 = vmatprep.subr.mxu0 0.0
    %484 = vmatpush1.msra.mxu0 %v78
    %485 = vmatprep.subr.mxu0 0.0
    %486 = vmatpush2.msra.mxu0 0.0
    %487 = vmatprep.subr.mxu0 0.0
    %488 = vmatpush2.msra.mxu0 0.0
    %489 = vmatprep.subr.mxu0 0.0
    %490 = vmatpush2.msra.mxu0 0.0
    %491 = vmatprep.subr.mxu0 0.0
    %492 = vmatpush2.msra.mxu0 0.0
    %493 = vmatprep.subr.mxu0 0.0
    %494 = vmatpush2.msra.mxu0 0.0
    %495 = vmatprep.subr.mxu0 0.0
    %496 = vmatpush2.msra.mxu0 0.0
    %497 = vmatprep.subr.mxu0 0.0
    %498 = vmatpush2.msra.mxu0 0.0
    %499 = vmatprep.subr.mxu0 0.0
    %500 = vmatpush2.msra.mxu0 0.0
    %501 = vmatprep.subr.mxu0 0.0
    %502 = vmatpush2.msra.mxu0 0.0
    %503 = vmatprep.subr.mxu0 0.0
    %504 = vmatpush2.msra.mxu0 0.0
    %505 = vmatprep.subr.mxu0 0.0
    %506 = vmatpush2.msra.mxu0 0.0
    %507 = vmatprep.subr.mxu0 0.0
    %508 = vmatpush2.msra.mxu0 0.0
    %509 = vmatprep.subr.mxu0 0.0
    %510 = vmatpush2.msra.mxu0 0.0
    %511 = vmatprep.subr.mxu0 0.0
    %512 = vmatpush2.msra.mxu0 0.0
    %513 = vmatprep.subr.mxu0 0.0
    %514 = vmatpush2.msra.mxu0 0.0
    %515 = vmatprep.subr.mxu0 0.0
    %516 = vmatpush2.msra.mxu0 0.0
    %517 = vmatprep.mubr.f32.mxu0 0.0
    %518 = vmatmul.mubr.f32.gmra.mxu0 %v452
    %v519 = vpop.f32.mrf.mxu0
    %v520 = vadd.f32 0.0, %v519
    %v521 = vpop.f32.mrf.mxu0
    %522 = vdwg.mxu0
    %v523 = vadd.f32 %v368, %v520
    %v524 = vadd.f32 %v523, %v451
    %v525 = vmax.f32 %v524, -0.1
    %v526 = vmin.f32 %v525, 0.1
    %v527 = vsub.f32 %v524, %v526
    %v528 = vsub.f32 %v524, %v527
    %v529 = vsub.f32 %v527, %v528
    %530 = vmatprep.subr.mxu0 0.0
    %531 = vmatpush1.msra.mxu0 %v93
    %532 = vmatprep.subr.mxu0 0.0
    %533 = vmatpush1.msra.mxu0 %v92
    %534 = vmatprep.subr.mxu0 0.0
    %535 = vmatpush1.msra.mxu0 %v91
    %536 = vmatprep.subr.mxu0 0.0
    %537 = vmatpush1.msra.mxu0 %v90
    %538 = vmatprep.subr.mxu0 0.0
    %539 = vmatpush1.msra.mxu0 %v89
    %540 = vmatprep.subr.mxu0 0.0
    %541 = vmatpush1.msra.mxu0 %v88
    %542 = vmatprep.subr.mxu0 0.0
    %543 = vmatpush1.msra.mxu0 %v87
    %544 = vmatprep.subr.mxu0 0.0
    %545 = vmatpush1.msra.mxu0 %v86
    %546 = vmatprep.subr.mxu0 0.0
    %547 = vmatpush1.msra.mxu0 %v85
    %548 = vmatprep.subr.mxu0 0.0
    %549 = vmatpush1.msra.mxu0 %v84
    %550 = vmatprep.subr.mxu0 0.0
    %551 = vmatpush1.msra.mxu0 %v83
    %552 = vmatprep.subr.mxu0 0.0
    %553 = vmatpush1.msra.mxu0 %v82
    %554 = vmatprep.subr.mxu0 0.0
    %555 = vmatpush1.msra.mxu0 %v81
    %556 = vmatprep.subr.mxu0 0.0
    %557 = vmatpush1.msra.mxu0 %v80
    %558 = vmatprep.subr.mxu0 0.0
    %559 = vmatpush1.msra.mxu0 %v79
    %560 = vmatprep.subr.mxu0 0.0
    %561 = vmatpush1.msra.mxu0 %v78
    %562 = vmatprep.subr.mxu0 0.0
    %563 = vmatpush2.msra.mxu0 0.0
    %564 = vmatprep.subr.mxu0 0.0
    %565 = vmatpush2.msra.mxu0 0.0
    %566 = vmatprep.subr.mxu0 0.0
    %567 = vmatpush2.msra.mxu0 0.0
    %568 = vmatprep.subr.mxu0 0.0
    %569 = vmatpush2.msra.mxu0 0.0
    %570 = vmatprep.subr.mxu0 0.0
    %571 = vmatpush2.msra.mxu0 0.0
    %572 = vmatprep.subr.mxu0 0.0
    %573 = vmatpush2.msra.mxu0 0.0
    %574 = vmatprep.subr.mxu0 0.0
    %575 = vmatpush2.msra.mxu0 0.0
    %576 = vmatprep.subr.mxu0 0.0
    %577 = vmatpush2.msra.mxu0 0.0
    %578 = vmatprep.subr.mxu0 0.0
    %579 = vmatpush2.msra.mxu0 0.0
    %580 = vmatprep.subr.mxu0 0.0
    %581 = vmatpush2.msra.mxu0 0.0
    %582 = vmatprep.subr.mxu0 0.0
    %583 = vmatpush2.msra.mxu0 0.0
    %584 = vmatprep.subr.mxu0 0.0
    %585 = vmatpush2.msra.mxu0 0.0
    %586 = vmatprep.subr.mxu0 0.0
    %587 = vmatpush2.msra.mxu0 0.0
    %588 = vmatprep.subr.mxu0 0.0
    %589 = vmatpush2.msra.mxu0 0.0
    %590 = vmatprep.subr.mxu0 0.0
    %591 = vmatpush2.msra.mxu0 0.0
    %592 = vmatprep.subr.mxu0 0.0
    %593 = vmatpush2.msra.mxu0 0.0
    %594 = vmatprep.mubr.f32.mxu0 0.0
    %595 = vmatmul.mubr.f32.gmra.mxu0 %v529
    %v596 = vpop.f32.mrf.mxu0
    %v597 = vadd.f32 0.0, %v596
    %v598 = vpop.f32.mrf.mxu0
    %599 = vdwg.mxu0
    %v600 = vadd.f32 %v368, %v597
    %v601 = vadd.f32 %v600, %v528
    %v602 = vmax.f32 %v601, -0.1
    %v603 = vmin.f32 %v602, 0.1
    %v604 = vsub.f32 %v601, %v603
    %v605 = vsub.f32 %v601, %v604
    %v606 = vsub.f32 %v604, %v605
    %607 = vmatprep.subr.mxu0 0.0
    %608 = vmatpush1.msra.mxu0 %v93
    %609 = vmatprep.subr.mxu0 0.0
    %610 = vmatpush1.msra.mxu0 %v92
    %611 = vmatprep.subr.mxu0 0.0
    %612 = vmatpush1.msra.mxu0 %v91
    %613 = vmatprep.subr.mxu0 0.0
    %614 = vmatpush1.msra.mxu0 %v90
    %615 = vmatprep.subr.mxu0 0.0
    %616 = vmatpush1.msra.mxu0 %v89
    %617 = vmatprep.subr.mxu0 0.0
    %618 = vmatpush1.msra.mxu0 %v88
    %619 = vmatprep.subr.mxu0 0.0
    %620 = vmatpush1.msra.mxu0 %v87
    %621 = vmatprep.subr.mxu0 0.0
    %622 = vmatpush1.msra.mxu0 %v86
    %623 = vmatprep.subr.mxu0 0.0
    %624 = vmatpush1.msra.mxu0 %v85
    %625 = vmatprep.subr.mxu0 0.0
    %626 = vmatpush1.msra.mxu0 %v84
    %627 = vmatprep.subr.mxu0 0.0
    %628 = vmatpush1.msra.mxu0 %v83
    %629 = vmatprep.subr.mxu0 0.0
    %630 = vmatpush1.msra.mxu0 %v82
    %631 = vmatprep.subr.mxu0 0.0
    %632 = vmatpush1.msra.mxu0 %v81
    %633 = vmatprep.subr.mxu0 0.0
    %634 = vmatpush1.msra.mxu0 %v80
    %635 = vmatprep.subr.mxu0 0.0
    %636 = vmatpush1.msra.mxu0 %v79
    %637 = vmatprep.subr.mxu0 0.0
    %638 = vmatpush1.msra.mxu0 %v78
    %639 = vmatprep.subr.mxu0 0.0
    %640 = vmatpush2.msra.mxu0 0.0
    %641 = vmatprep.subr.mxu0 0.0
    %642 = vmatpush2.msra.mxu0 0.0
    %643 = vmatprep.subr.mxu0 0.0
    %644 = vmatpush2.msra.mxu0 0.0
    %645 = vmatprep.subr.mxu0 0.0
    %646 = vmatpush2.msra.mxu0 0.0
    %647 = vmatprep.subr.mxu0 0.0
    %648 = vmatpush2.msra.mxu0 0.0
    %649 = vmatprep.subr.mxu0 0.0
    %650 = vmatpush2.msra.mxu0 0.0
    %651 = vmatprep.subr.mxu0 0.0
    %652 = vmatpush2.msra.mxu0 0.0
    %653 = vmatprep.subr.mxu0 0.0
    %654 = vmatpush2.msra.mxu0 0.0
    %655 = vmatprep.subr.mxu0 0.0
    %656 = vmatpush2.msra.mxu0 0.0
    %657 = vmatprep.subr.mxu0 0.0
    %658 = vmatpush2.msra.mxu0 0.0
    %659 = vmatprep.subr.mxu0 0.0
    %660 = vmatpush2.msra.mxu0 0.0
    %661 = vmatprep.subr.mxu0 0.0
    %662 = vmatpush2.msra.mxu0 0.0
    %663 = vmatprep.subr.mxu0 0.0
    %664 = vmatpush2.msra.mxu0 0.0
    %665 = vmatprep.subr.mxu0 0.0
    %666 = vmatpush2.msra.mxu0 0.0
    %667 = vmatprep.subr.mxu0 0.0
    %668 = vmatpush2.msra.mxu0 0.0
    %669 = vmatprep.subr.mxu0 0.0
    %670 = vmatpush2.msra.mxu0 0.0
    %671 = vmatprep.mubr.f32.mxu0 0.0
    %672 = vmatmul.mubr.f32.gmra.mxu0 %v606
    %v673 = vpop.f32.mrf.mxu0
    %v674 = vadd.f32 0.0, %v673
    %v675 = vpop.f32.mrf.mxu0
    %676 = vdwg.mxu0
    %v677 = vadd.f32 %v368, %v674
    %v678 = vadd.f32 %v677, %v605
    %v679 = vmax.f32 %v678, -0.1
    %v680 = vmin.f32 %v679, 0.1
    %v681 = vsub.f32 %v678, %v680
    %682 = vst [vmem:[#allocation8] sm:$0xff] %v286
    %683 = vst [vmem:[#allocation8 + $0x8] sm:$0xff] %v681
    %684 = vrot.lane.b32.xlu0 %v297, 32
    %v685 = vpop.permute.xlu0 %684
    %v687 = vsel %vm112, %v230, %v685
    %v688 = vsel %vm186, %v687, 0.0
    %689 = vst [vmem:[#allocation8 + $0x10] sm:$0xff] %v688
    // Predicated region
    $region26: #{tpu_custom_call.1} parent=1 // pred_check
      _
    $region27: #{tpu_custom_call.1} parent=1 // pred_check_branch
      %691 = sbr.rel (0) target = $region29
    $region28: #{tpu_custom_call.1} parent=1 // pred_region
      %s693 = ssub.s32 384, 384
      %694 = vsyncadd [#allocation4], %s693
      %s695 = sshll.u32 [#allocation8], 4
      %s696 = int_to_ptr.vmem [resolvable:$true] %s695
      %701 = dma.vmem_to_hbm [thread:$0]  %s696, 384, %s3, [#allocation4], 128, 128, 8
    $region29: #{tpu_custom_call.1} parent=1 // pred_fallthru
      _
    // Predicated region
    $region30: #{tpu_custom_call.1} parent=1 // pred_check
      _
    $region31: #{tpu_custom_call.1} parent=1 // pred_check_branch
      %703 = sbr.rel (0) target = $region33
    $region32: #{tpu_custom_call.1} parent=1 // pred_region
      %704 = dma.done [#allocation4], 384
    $region33: #{tpu_custom_call.1} parent=1 // pred_fallthru
      _
    %705 = vsyncpa [#allocation3], 1
    %706 = vsyncpa [#allocation6], 1
    %707 = vsyncpa [#allocation4], 1

</llo_original>
